<compile_context>
chip_gen: v7x
topology: tpu7x:2x2x1
jax: 0.10.0
libtpu: 0.0.40
codegen_flags: <defaults>
</compile_context>

<pallas_src>
import functools

import jax
import jax.numpy as jnp
from jax.experimental import pallas as pl
from jax.experimental.pallas import tpu as pltpu


def _round_up(v, m):
    return ((v + m - 1) // m) * m


def _cdiv(a, b):
    return (a + b - 1) // b


def _conv_kernel(x_ref, w_ref, o_ref, stage_ref, *, kh, kw, W, c_blk, tn, whole_w):
    """One (batch, spatial-tile, channel-block) grid step.

    x_ref    : (1, 1, c_blk, tn + halo_pad)      bf16  tile + halo input window
    w_ref    : (1 | c_tiles, O_pad, KK*c_blk)    bf16  patch-major weight panel
    o_ref    : (1, O_pad, tn)                    f32   lane-dense output tile
                                                       (VMEM-resident across c)
    stage_ref: (KK*c_blk, tn)                    bf16  implicit-im2col panel
    """
    c_idx = pl.program_id(2)

    # Implicit im2col: stage the kh*kw lane-shifted slices of the resident
    # (tile + halo) row into one (KK*c_blk, tn) panel.  All offsets are static.
    # TODO(synk): if the XLU shift/combine slot binds (bundle dump), hoist the
    # kw lane shifts out of the kh loop for row-aligned (W % 128 == 0) images.
    for ki in range(kh):
        for kj in range(kw):
            p = ki * kw + kj
            shift = ki * W + kj
            stage_ref[pl.ds(p * c_blk, c_blk), :] = x_ref[0, 0, :, pl.ds(shift, tn)]

    # Single big-K MXU dot: (O_pad, KK*c_blk) x (KK*c_blk, tn), f32 accumulate.
    w_mat = w_ref[c_idx] if whole_w else w_ref[0]
    contrib = jnp.dot(w_mat, stage_ref[...], preferred_element_type=jnp.float32)

    # Accumulate straight into the output block (no scratch accumulator): its
    # block index (b, 0, n) is constant along the innermost (arbitrary) c axis.
    @pl.when(c_idx == 0)
    def _init():
        o_ref[0, :, :] = contrib

    @pl.when(c_idx > 0)
    def _accumulate():
        o_ref[0, :, :] = o_ref[0, :, :] + contrib


def convolution_layer_forward(
    x,
    weight,
    *,
    compute_dtype=jnp.bfloat16,
    tn_max=4096,
    vmem_budget_bytes=40 * 1024 * 1024,   # block budget; safe for v7x 64 MiB/TC
):
    """Pallas equivalent of ConvolutionLayer.forward (valid conv, stride 1)."""
    B, C, H, W = x.shape
    O, C2, kh, kw = weight.shape
    assert C == C2
    Ho, Wo = H - kh + 1, W - kw + 1
    L = H * W
    KK = kh * kw
    halo = (kh - 1) * W + (kw - 1)
    halo_pad = _round_up(halo, 128)
    itemsize = jnp.dtype(compute_dtype).itemsize

    # ---- channel / output-channel padding ------------------------------------
    O_pad = _round_up(O, 16)
    if _round_up(C, 16) <= 256:
        c_blk = _round_up(C, 16)          # one channel block; K = KK*c_blk >= 144
    else:
        c_blk = 256                       # K = 2304 per dot
    C_pad = _round_up(C, c_blk)
    c_tiles = C_pad // c_blk
    Kc = KK * c_blk

    # Weight panel: hold the whole thing in VMEM (grid-invariant block) when it
    # is small and there is more than one channel block; otherwise one block
    # per channel tile (constant index when c_tiles == 1 -> fetched once).
    w_blk_bytes = O_pad * Kc * itemsize
    whole_w = (c_tiles > 1) and (2 * c_tiles * w_blk_bytes <= 8 * 1024 * 1024)
    w_bufs_bytes = 2 * (c_tiles if whole_w else 1) * w_blk_bytes

    # ---- VMEM-driven spatial tile size ----------------------------------------
    # need(tn) = 2*x_blk + w_bufs + 2*o_blk + stage
    per_tn = 2 * itemsize * c_blk + 8 * O_pad + itemsize * Kc
    fixed = 2 * itemsize * c_blk * halo_pad + w_bufs_bytes
    avail = vmem_budget_bytes - fixed
    tn_cap = (avail // per_tn // 128) * 128 if avail > 0 else 0
    tn_cap = max(128, min(tn_cap, _round_up(tn_max, 128)))

    n_tiles = _cdiv(L, tn_cap)
    tn = _round_up(_cdiv(L, n_tiles), 128)        # minimize last-tile padding
    n_tiles = _cdiv(L, tn)
    if B == 1 and n_tiles == 1 and tn > 128:
        # v7x: give both TensorCores a parallel grid unit even when B == 1.
        tn = _round_up(_cdiv(L, 2), 128)
        n_tiles = _cdiv(L, tn)
    L_out_pad = n_tiles * tn
    tn_in = tn + halo_pad
    L_total = L_out_pad + halo_pad

    # ---- cheap input prep: reshape + zero-pad + bf16 cast (no im2col) ---------
    x_flat = x.reshape(B, C, L).astype(compute_dtype)
    x_flat = jnp.pad(x_flat, ((0, 0), (0, C_pad - C), (0, L_total - L)))
    if n_tiles == 1:
        x_win = x_flat[:, None, :, :]                       # (B, 1, C_pad, tn_in)
    else:
        # Overlapping tile+halo windows (only ~halo/tn duplication of x).
        # TODO(synk): replace with an element-offset (pl.Element) x BlockSpec or a
        # manual-DMA halo fetch to avoid even this small wrapper-side copy.
        x_win = jnp.stack(
            [x_flat[:, :, i * tn:i * tn + tn_in] for i in range(n_tiles)], axis=1)

    # Weights -> (c_tiles, O_pad, KK*c_blk), patch-major within the K axis.
    w_pad = jnp.pad(weight.astype(compute_dtype),
                    ((0, O_pad - O), (0, C_pad - C), (0, 0), (0, 0)))
    w_r = w_pad.reshape(O_pad, c_tiles, c_blk, kh, kw)
    w_r = jnp.transpose(w_r, (1, 0, 3, 4, 2)).reshape(c_tiles, O_pad, Kc)

    # ---- specs ----------------------------------------------------------------
    x_spec = pl.BlockSpec((1, 1, c_blk, tn_in), lambda b, n, c: (b, n, c, 0))
    if whole_w:
        w_spec = pl.BlockSpec((c_tiles, O_pad, Kc), lambda b, n, c: (0, 0, 0))
    else:
        w_spec = pl.BlockSpec((1, O_pad, Kc), lambda b, n, c: (c, 0, 0))
    out_spec = pl.BlockSpec((1, O_pad, tn), lambda b, n, c: (b, 0, n))

    # ---- VMEM accounting / limit (blocks double-buffered + staging panel) -----
    x_blk_bytes = c_blk * tn_in * itemsize
    o_blk_bytes = O_pad * tn * 4
    stage_bytes = Kc * tn * itemsize
    vmem_need = 2 * x_blk_bytes + w_bufs_bytes + 2 * o_blk_bytes + stage_bytes
    vmem_limit = max(2 * vmem_need, 32 * 1024 * 1024)
    vmem_limit = min(vmem_limit, max(vmem_budget_bytes + 16 * 1024 * 1024,
                                     vmem_need + 8 * 1024 * 1024))
    vmem_limit = int(min(vmem_limit, 100 * 1024 * 1024))

    w_fetches = 1 if (whole_w or c_tiles == 1) else B * n_tiles
    cost = pl.CostEstimate(
        flops=2 * B * n_tiles * c_tiles * O_pad * Kc * tn,
        transcendentals=0,
        bytes_accessed=int(B * n_tiles * c_tiles * c_blk * tn_in * itemsize
                           + w_fetches * c_tiles * O_pad * Kc * itemsize
                           + B * O_pad * L_out_pad * 4),
    )

    kernel = functools.partial(_conv_kernel, kh=kh, kw=kw, W=W, c_blk=c_blk,
                               tn=tn, whole_w=whole_w)

    out_full = pl.pallas_call(
        kernel,
        out_shape=jax.ShapeDtypeStruct((B, O_pad, L_out_pad), jnp.float32),
        grid_spec=pltpu.PrefetchScalarGridSpec(
            num_scalar_prefetch=0,
            grid=(B, n_tiles, c_tiles),
            in_specs=[x_spec, w_spec],
            out_specs=out_spec,
            scratch_shapes=[pltpu.VMEM((Kc, tn), compute_dtype)],
        ),
        compiler_params=pltpu.CompilerParams(
            dimension_semantics=("parallel", "parallel", "arbitrary"),
            vmem_limit_bytes=vmem_limit,
        ),
        cost_estimate=cost,
    )(x_win, w_r)

    # Drop padded O rows / wraparound spatial columns (slice only, no transpose).
    out = out_full[:, :O, :L].reshape(B, O, H, W)[:, :, :Ho, :Wo]
    return out


if __name__ == "__main__":
    key = jax.random.PRNGKey(0)
    kx, kw_key = jax.random.split(key)

    B, C, H, W = 2, 4, 16, 16
    O, ksize = 8, 3

    x = jax.random.normal(kx, (B, C, H, W), dtype=jnp.float32)
    weight = jax.random.normal(kw_key, (O, C, ksize, ksize), dtype=jnp.float32)

    fwd = jax.jit(convolution_layer_forward)
    out = jax.block_until_ready(fwd(x, weight))

    # Reference: same valid conv on the bf16-quantized operands (the kernel
    # feeds the MXU bf16 inputs with f32 accumulation).
    xq = x.astype(jnp.bfloat16).astype(jnp.float32)
    wq = weight.astype(jnp.bfloat16).astype(jnp.float32)
    ref = jax.lax.conv_general_dilated(
        xq, wq, window_strides=(1, 1), padding="VALID",
        dimension_numbers=("NCHW", "OIHW", "NCHW"),
        precision=jax.lax.Precision.HIGHEST)

    assert out.shape == (B, O, H - ksize + 1, W - ksize + 1), out.shape
    assert jnp.allclose(out, ref, atol=2e-3, rtol=2e-3), \
        float(jnp.max(jnp.abs(out - ref)))

    print("KERNEL_OK")
</pallas_src>

<mosaic_0001>
module attributes {stable_mosaic.version = 11 : i64} {
  func.func @_conv_kernel(%arg0: i32, %arg1: i32, %arg2: i32, %arg3: memref<1x1x16x384xbf16, #tpu.memory_space<vmem>>, %arg4: memref<1x16x144xbf16, #tpu.memory_space<vmem>>, %arg5: memref<1x16x256xf32, #tpu.memory_space<vmem>>, %arg6: memref<144x256xbf16, #tpu.memory_space<vmem>>) attributes {dimension_semantics = [#tpu.dimension_semantics<parallel>, #tpu.dimension_semantics<parallel>, #tpu.dimension_semantics<arbitrary>], iteration_bounds = array<i64: 2, 1, 1>, scalar_prefetch = 0 : i64, scratch_operands = 1 : i64, tpu.core_type = #tpu.core_type<tc>, window_params = [{transform_indices = @transform_0, window_bounds = array<i64: 1, 1, 16, 384>}, {transform_indices = @transform_1, window_bounds = array<i64: 1, 16, 144>}, {transform_indices = @transform_2, window_bounds = array<i64: 1, 16, 256>}]} {
    %c0 = arith.constant 0 : index
    %c0_0 = arith.constant 0 : index
    %c0_1 = arith.constant 0 : index
    %c0_2 = arith.constant 0 : index
    %0 = vector.load %arg3[%c0, %c0_0, %c0_1, %c0_2] : memref<1x1x16x384xbf16, #tpu.memory_space<vmem>>, vector<1x1x16x256xbf16>
    %1 = vector.shape_cast %0 : vector<1x1x16x256xbf16> to vector<16x256xbf16>
    %c0_3 = arith.constant 0 : index
    %c0_4 = arith.constant 0 : index
    %2 = vector.load %arg6[%c0_3, %c0_4] : memref<144x256xbf16, #tpu.memory_space<vmem>>, vector<16x256xbf16>
    tpu.vector_store %arg6[%c0_3, %c0_4], %1 {strides = array<i32>} : memref<144x256xbf16, #tpu.memory_space<vmem>>, vector<16x256xbf16>,
    %c0_5 = arith.constant 0 : index
    %c0_6 = arith.constant 0 : index
    %c0_7 = arith.constant 0 : index
    %c1 = arith.constant 1 : index
    %3 = vector.load %arg3[%c0_5, %c0_6, %c0_7, %c1] : memref<1x1x16x384xbf16, #tpu.memory_space<vmem>>, vector<1x1x16x256xbf16>
    %4 = vector.shape_cast %3 : vector<1x1x16x256xbf16> to vector<16x256xbf16>
    %c16 = arith.constant 16 : index
    %c0_8 = arith.constant 0 : index
    %5 = vector.load %arg6[%c16, %c0_8] : memref<144x256xbf16, #tpu.memory_space<vmem>>, vector<16x256xbf16>
    tpu.vector_store %arg6[%c16, %c0_8], %4 {strides = array<i32>} : memref<144x256xbf16, #tpu.memory_space<vmem>>, vector<16x256xbf16>,
    %c0_9 = arith.constant 0 : index
    %c0_10 = arith.constant 0 : index
    %c0_11 = arith.constant 0 : index
    %c2 = arith.constant 2 : index
    %6 = vector.load %arg3[%c0_9, %c0_10, %c0_11, %c2] : memref<1x1x16x384xbf16, #tpu.memory_space<vmem>>, vector<1x1x16x256xbf16>
    %7 = vector.shape_cast %6 : vector<1x1x16x256xbf16> to vector<16x256xbf16>
    %c32 = arith.constant 32 : index
    %c0_12 = arith.constant 0 : index
    %8 = vector.load %arg6[%c32, %c0_12] : memref<144x256xbf16, #tpu.memory_space<vmem>>, vector<16x256xbf16>
    tpu.vector_store %arg6[%c32, %c0_12], %7 {strides = array<i32>} : memref<144x256xbf16, #tpu.memory_space<vmem>>, vector<16x256xbf16>,
    %c0_13 = arith.constant 0 : index
    %c0_14 = arith.constant 0 : index
    %c0_15 = arith.constant 0 : index
    %c16_16 = arith.constant 16 : index
    %9 = vector.load %arg3[%c0_13, %c0_14, %c0_15, %c16_16] : memref<1x1x16x384xbf16, #tpu.memory_space<vmem>>, vector<1x1x16x256xbf16>
    %10 = vector.shape_cast %9 : vector<1x1x16x256xbf16> to vector<16x256xbf16>
    %c48 = arith.constant 48 : index
    %c0_17 = arith.constant 0 : index
    %11 = vector.load %arg6[%c48, %c0_17] : memref<144x256xbf16, #tpu.memory_space<vmem>>, vector<16x256xbf16>
    tpu.vector_store %arg6[%c48, %c0_17], %10 {strides = array<i32>} : memref<144x256xbf16, #tpu.memory_space<vmem>>, vector<16x256xbf16>,
    %c0_18 = arith.constant 0 : index
    %c0_19 = arith.constant 0 : index
    %c0_20 = arith.constant 0 : index
    %c17 = arith.constant 17 : index
    %12 = vector.load %arg3[%c0_18, %c0_19, %c0_20, %c17] : memref<1x1x16x384xbf16, #tpu.memory_space<vmem>>, vector<1x1x16x256xbf16>
    %13 = vector.shape_cast %12 : vector<1x1x16x256xbf16> to vector<16x256xbf16>
    %c64 = arith.constant 64 : index
    %c0_21 = arith.constant 0 : index
    %14 = vector.load %arg6[%c64, %c0_21] : memref<144x256xbf16, #tpu.memory_space<vmem>>, vector<16x256xbf16>
    tpu.vector_store %arg6[%c64, %c0_21], %13 {strides = array<i32>} : memref<144x256xbf16, #tpu.memory_space<vmem>>, vector<16x256xbf16>,
    %c0_22 = arith.constant 0 : index
    %c0_23 = arith.constant 0 : index
    %c0_24 = arith.constant 0 : index
    %c18 = arith.constant 18 : index
    %15 = vector.load %arg3[%c0_22, %c0_23, %c0_24, %c18] : memref<1x1x16x384xbf16, #tpu.memory_space<vmem>>, vector<1x1x16x256xbf16>
    %16 = vector.shape_cast %15 : vector<1x1x16x256xbf16> to vector<16x256xbf16>
    %c80 = arith.constant 80 : index
    %c0_25 = arith.constant 0 : index
    %17 = vector.load %arg6[%c80, %c0_25] : memref<144x256xbf16, #tpu.memory_space<vmem>>, vector<16x256xbf16>
    tpu.vector_store %arg6[%c80, %c0_25], %16 {strides = array<i32>} : memref<144x256xbf16, #tpu.memory_space<vmem>>, vector<16x256xbf16>,
    %c0_26 = arith.constant 0 : index
    %c0_27 = arith.constant 0 : index
    %c0_28 = arith.constant 0 : index
    %c32_29 = arith.constant 32 : index
    %18 = vector.load %arg3[%c0_26, %c0_27, %c0_28, %c32_29] : memref<1x1x16x384xbf16, #tpu.memory_space<vmem>>, vector<1x1x16x256xbf16>
    %19 = vector.shape_cast %18 : vector<1x1x16x256xbf16> to vector<16x256xbf16>
    %c96 = arith.constant 96 : index
    %c0_30 = arith.constant 0 : index
    %20 = vector.load %arg6[%c96, %c0_30] : memref<144x256xbf16, #tpu.memory_space<vmem>>, vector<16x256xbf16>
    tpu.vector_store %arg6[%c96, %c0_30], %19 {strides = array<i32>} : memref<144x256xbf16, #tpu.memory_space<vmem>>, vector<16x256xbf16>,
    %c0_31 = arith.constant 0 : index
    %c0_32 = arith.constant 0 : index
    %c0_33 = arith.constant 0 : index
    %c33 = arith.constant 33 : index
    %21 = vector.load %arg3[%c0_31, %c0_32, %c0_33, %c33] : memref<1x1x16x384xbf16, #tpu.memory_space<vmem>>, vector<1x1x16x256xbf16>
    %22 = vector.shape_cast %21 : vector<1x1x16x256xbf16> to vector<16x256xbf16>
    %c112 = arith.constant 112 : index
    %c0_34 = arith.constant 0 : index
    %23 = vector.load %arg6[%c112, %c0_34] : memref<144x256xbf16, #tpu.memory_space<vmem>>, vector<16x256xbf16>
    tpu.vector_store %arg6[%c112, %c0_34], %22 {strides = array<i32>} : memref<144x256xbf16, #tpu.memory_space<vmem>>, vector<16x256xbf16>,
    %c0_35 = arith.constant 0 : index
    %c0_36 = arith.constant 0 : index
    %c0_37 = arith.constant 0 : index
    %c34 = arith.constant 34 : index
    %24 = vector.load %arg3[%c0_35, %c0_36, %c0_37, %c34] : memref<1x1x16x384xbf16, #tpu.memory_space<vmem>>, vector<1x1x16x256xbf16>
    %25 = vector.shape_cast %24 : vector<1x1x16x256xbf16> to vector<16x256xbf16>
    %c128 = arith.constant 128 : index
    %c0_38 = arith.constant 0 : index
    %26 = vector.load %arg6[%c128, %c0_38] : memref<144x256xbf16, #tpu.memory_space<vmem>>, vector<16x256xbf16>
    tpu.vector_store %arg6[%c128, %c0_38], %25 {strides = array<i32>} : memref<144x256xbf16, #tpu.memory_space<vmem>>, vector<16x256xbf16>,
    %c0_39 = arith.constant 0 : index
    %c0_40 = arith.constant 0 : index
    %c0_41 = arith.constant 0 : index
    %27 = vector.load %arg4[%c0_39, %c0_40, %c0_41] : memref<1x16x144xbf16, #tpu.memory_space<vmem>>, vector<1x16x144xbf16>
    %28 = vector.shape_cast %27 : vector<1x16x144xbf16> to vector<16x144xbf16>
    %c0_42 = arith.constant 0 : index
    %c0_43 = arith.constant 0 : index
    %29 = vector.load %arg6[%c0_42, %c0_43] : memref<144x256xbf16, #tpu.memory_space<vmem>>, vector<144x256xbf16>
    %cst = arith.constant dense<0.000000e+00> : vector<16x256xf32>
    %30 = tpu.matmul %28, %29, %cst {dimension_numbers = #tpu.dot_dimension_numbers<[1], [0], [0], [1], [0, 0, 1, 1], [], []>} : vector<16x144xbf16>, vector<144x256xbf16>, vector<16x256xf32> -> vector<16x256xf32>
    %c0_i32 = arith.constant 0 : i32
    %31 = arith.cmpi eq, %arg2, %c0_i32 : i32
    %32 = arith.extui %31 : i1 to i32
    %c0_i32_44 = arith.constant 0 : i32
    %33 = arith.cmpi ne, %32, %c0_i32_44 : i32
    scf.if %33 {
      %c0_47 = arith.constant 0 : index
      %c0_48 = arith.constant 0 : index
      %c0_49 = arith.constant 0 : index
      %37 = vector.load %arg5[%c0_47, %c0_48, %c0_49] : memref<1x16x256xf32, #tpu.memory_space<vmem>>, vector<1x16x256xf32>
      %38 = vector.shape_cast %37 : vector<1x16x256xf32> to vector<16x256xf32>
      %39 = vector.shape_cast %30 : vector<16x256xf32> to vector<1x16x256xf32>
      tpu.vector_store %arg5[%c0_47, %c0_48, %c0_49], %39 {strides = array<i32>} : memref<1x16x256xf32, #tpu.memory_space<vmem>>, vector<1x16x256xf32>,
    } else {
    }
    %c0_i32_45 = arith.constant 0 : i32
    %34 = arith.cmpi sgt, %arg2, %c0_i32_45 : i32
    %35 = arith.extui %34 : i1 to i32
    %c0_i32_46 = arith.constant 0 : i32
    %36 = arith.cmpi ne, %35, %c0_i32_46 : i32
    scf.if %36 {
      %c0_47 = arith.constant 0 : index
      %c0_48 = arith.constant 0 : index
      %c0_49 = arith.constant 0 : index
      %37 = vector.load %arg5[%c0_47, %c0_48, %c0_49] : memref<1x16x256xf32, #tpu.memory_space<vmem>>, vector<1x16x256xf32>
      %38 = vector.shape_cast %37 : vector<1x16x256xf32> to vector<16x256xf32>
      %39 = arith.addf %38, %30 : vector<16x256xf32>
      %c0_50 = arith.constant 0 : index
      %c0_51 = arith.constant 0 : index
      %c0_52 = arith.constant 0 : index
      %40 = vector.load %arg5[%c0_50, %c0_51, %c0_52] : memref<1x16x256xf32, #tpu.memory_space<vmem>>, vector<1x16x256xf32>
      %41 = vector.shape_cast %40 : vector<1x16x256xf32> to vector<16x256xf32>
      %42 = vector.shape_cast %39 : vector<16x256xf32> to vector<1x16x256xf32>
      tpu.vector_store %arg5[%c0_50, %c0_51, %c0_52], %42 {strides = array<i32>} : memref<1x16x256xf32, #tpu.memory_space<vmem>>, vector<1x16x256xf32>,
    } else {
    }
    return
  }
  func.func @transform_0(%arg0: i32, %arg1: i32, %arg2: i32) -> (i32, i32, i32, i32) {
    %c0_i32 = arith.constant 0 : i32
    %c0_i32_0 = arith.constant 0 : i32
    return %arg0, %arg1, %arg2, %c0_i32 : i32, i32, i32, i32
  }
  func.func @transform_1(%arg0: i32, %arg1: i32, %arg2: i32) -> (i32, i32, i32) {
    %c0_i32 = arith.constant 0 : i32
    %c0_i32_0 = arith.constant 0 : i32
    %c0_i32_1 = arith.constant 0 : i32
    return %arg2, %c0_i32, %c0_i32_0 : i32, i32, i32
  }
  func.func @transform_2(%arg0: i32, %arg1: i32, %arg2: i32) -> (i32, i32, i32) {
    %c0_i32 = arith.constant 0 : i32
    %c0_i32_0 = arith.constant 0 : i32
    return %arg0, %c0_i32, %arg1 : i32, i32, i32
  }
}

</mosaic_0001>

<llo_original>
// kernel: convolution_layer_forward.1
$region0: #{convolution_layer_forward.1}
  #allocation0 [shape = 'u32[]', space=smem, size = 0x4, offset = 0x4, fixed_abs, tag = 'smem constant byte address 0x4 - core index']
  #allocation1 [shape = 'u32[144,128]{1,0:T(1,128)}', space=vmem, size = 0x12000, scoped, tag = 'internal scratch']
  #allocation2 [shape = 'bf16[144,256]{1,0:T(16,128)(2,1)}', space=vmem, size = 0x12000, scoped, tag = 'scratch operand']
  %s0 = inlined_call_operand.vmem [shape: bf16[2,1,16,384], index: 0, kind: input, shape index: {}]
  %s1 = inlined_call_operand.vmem [shape: bf16[1,16,144], index: 1, kind: input, shape index: {}]
  %s2 = inlined_call_operand.vmem [shape: f32[2,16,256], index: 2, kind: output, shape index: {}]
  %s3 = sld [smem:[#allocation0]]
  $region49: #{convolution_layer_forward.1} parent=0
    _
  %s5 = ssub.s32 1, %s3
  %s6 = scalar_select 0, %s5, %s3
  loop: start=0, step=1, limit=4
  $region2: #{convolution_layer_forward.1} parent=0 // loop_pre_header
    _
  $region3: #{convolution_layer_forward.1} parent=0 // loop_header
    %s8 = sphi 0, %s12
    %p9 = scmp.ge.s32.totalorder %s8, 4
    %s15 = sphi 0, %s34
    %s16 = sphi 0, %s30
    %s17 = sphi 0, %s26
    %s18 = sphi 0, %s15
    %s19 = sphi 0, %s16
    %s20 = sphi 0, %s17
    %s21 = sphi 0, %s18
    %s22 = sphi 0, %s19
    %s23 = sphi 0, %s20
    %s41 = sphi 0, %s43
    %s44 = sphi 0, %s41
    %s45 = sphi 0, %s44
    %s61 = sphi 0, %s45
    %s67 = sphi 0, %s69
    %s70 = sphi 0, %s67
    %s71 = sphi 0, %s70
    %s87 = sphi 0, %s71
    %s95 = sphi 0, %s97
    %s98 = sphi 0, %s95
    %s99 = sphi 0, %s98
    %s115 = sphi 0, %s99
  $region4: #{convolution_layer_forward.1} parent=0 // loop_header_branch
    %11 = sbr.rel (%p9) target = $region8
  $region5: #{convolution_layer_forward.1} parent=0 // loop_body
    %s13 = ssub.s32 %s8, 1
    %s14 = ssub.s32 %s8, 2
    %s24 = sadd.s32 1, %s17
    %p25 = scmp.ge.s32.totalorder %s24, 1
    %s26 = scalar_select %p25, 0, %s24
    %s27 = sadd.s32 1, %s16
    %s28 = scalar_select %p25, %s27, %s16
    %p29 = scmp.ge.s32.totalorder %s28, 1
    %s30 = scalar_select %p29, 0, %s28
    %s31 = sadd.s32 1, %s15
    %s32 = scalar_select %p29, %s31, %s15
    %p33 = scmp.ge.s32.totalorder %s32, 2
    %s34 = scalar_select %p33, 0, %s32
    %s35 = ssub.s32 %s15, %s34
    %s36 = ssub.s32 %s16, %s30
    %s37 = sor.u32 %s35, %s36
    %s38 = ssub.s32 %s17, %s26
    %s39 = sor.u32 %s37, %s38
    %p40 = scmp.eq.s32.totalorder %s39, 0
    %s42 = sadd.s32 %s41, 1
    %s43 = scalar_select %p40, %s41, %s42
    %p46 = pneg %p40
    %p47 = scmp.eq.s32.totalorder %s8, 1
    %p48 = por %p46, %p47
    %p49 = scmp.ne.s32.totalorder %s41, %s44
    %p50 = scmp.eq.s32.totalorder %s8, 0
    %p51 = por %p49, %p50
    %p52 = scmp.ne.s32.totalorder %s41, %s44
    %p53 = scmp.eq.s32.totalorder %s13, 1
    %p54 = por %p52, %p53
    %p55 = scmp.ne.s32.totalorder %s44, %s45
    %p56 = scmp.eq.s32.totalorder %s13, 0
    %p57 = por %p55, %p56
    %p58 = scmp.ne.s32.totalorder %s44, %s45
    %p59 = scmp.eq.s32.totalorder %s14, 1
    %p60 = por %p58, %p59
    %p62 = scmp.ne.s32.totalorder %s45, %s61
    %p63 = scmp.eq.s32.totalorder %s14, 0
    %p64 = por %p62, %p63
    %s65 = ssub.s32 %s17, %s26
    %p66 = scmp.eq.s32.totalorder %s65, 0
    %s68 = sadd.s32 %s67, 1
    %s69 = scalar_select %p66, %s67, %s68
    %p72 = pneg %p66
    %p73 = scmp.eq.s32.totalorder %s8, 1
    %p74 = por %p72, %p73
    %p75 = scmp.ne.s32.totalorder %s67, %s70
    %p76 = scmp.eq.s32.totalorder %s8, 0
    %p77 = por %p75, %p76
    %p78 = scmp.ne.s32.totalorder %s67, %s70
    %p79 = scmp.eq.s32.totalorder %s13, 1
    %p80 = por %p78, %p79
    %p81 = scmp.ne.s32.totalorder %s70, %s71
    %p82 = scmp.eq.s32.totalorder %s13, 0
    %p83 = por %p81, %p82
    %p84 = scmp.ne.s32.totalorder %s70, %s71
    %p85 = scmp.eq.s32.totalorder %s14, 1
    %p86 = por %p84, %p85
    %p88 = scmp.ne.s32.totalorder %s71, %s87
    %p89 = scmp.eq.s32.totalorder %s14, 0
    %p90 = por %p88, %p89
    %s91 = ssub.s32 %s15, %s34
    %s92 = ssub.s32 %s16, %s30
    %s93 = sor.u32 %s91, %s92
    %p94 = scmp.eq.s32.totalorder %s93, 0
    %s96 = sadd.s32 %s95, 1
    %s97 = scalar_select %p94, %s95, %s96
    %p100 = pneg %p94
    %p101 = scmp.eq.s32.totalorder %s8, 1
    %p102 = por %p100, %p101
    %p103 = scmp.ne.s32.totalorder %s95, %s98
    %p104 = scmp.eq.s32.totalorder %s8, 0
    %p105 = por %p103, %p104
    %p106 = scmp.ne.s32.totalorder %s95, %s98
    %p107 = scmp.eq.s32.totalorder %s13, 1
    %p108 = por %p106, %p107
    %p109 = scmp.ne.s32.totalorder %s98, %s99
    %p110 = scmp.eq.s32.totalorder %s13, 0
    %p111 = por %p109, %p110
    %p112 = scmp.ne.s32.totalorder %s98, %s99
    %p113 = scmp.eq.s32.totalorder %s14, 1
    %p114 = por %p112, %p113
    %p116 = scmp.ne.s32.totalorder %s99, %s115
    %p117 = scmp.eq.s32.totalorder %s14, 0
    %p118 = por %p116, %p117
    %p119 = scmp.le.s32.totalorder 1, %s8
    %p120 = scmp.lt.s32.totalorder %s8, 3
    %p121 = pnand %p119, %p120
    %p122 = pneg %p121
    // Predicated region
    $region9: #{convolution_layer_forward.1} parent=5 // pred_check
      _
    $region10: #{convolution_layer_forward.1} parent=5 // pred_check_branch
      %124 = sbr.rel (%p121) target = $region12
    $region11: #{convolution_layer_forward.1} parent=5 // pred_region
      %s125 = ssub.s32 %s8, 1
      // Predicated region
      $region13: #{convolution_layer_forward.1} parent=11 // pred_check
        %p126 = pneg %p83
      $region14: #{convolution_layer_forward.1} parent=11 // pred_check_branch
        %128 = sbr.rel (%p126) target = $region16
      $region15: #{convolution_layer_forward.1} parent=11 // pred_region
        %p129 = scmp.lt.s32.totalorder %s20, 0
        %s130 = scalar_select %p129, %s20, 0
        %s131 = smul.addr %s130, 4
        %s132 = smul.addr %s131, 4
        %s133 = scalar_lea.vmem %s1, %s132
      $region16: #{convolution_layer_forward.1} parent=11 // pred_fallthru
        _
    $region12: #{convolution_layer_forward.1} parent=5 // pred_fallthru
      _
    %p134 = scmp.lt.s32.totalorder %s8, 2
    // Predicated region
    $region17: #{convolution_layer_forward.1} parent=5 // pred_check
      %p135 = pneg %p134
    $region18: #{convolution_layer_forward.1} parent=5 // pred_check_branch
      %137 = sbr.rel (%p135) target = $region20
    $region19: #{convolution_layer_forward.1} parent=5 // pred_region
      // Predicated region
      $region21: #{convolution_layer_forward.1} parent=19 // pred_check
        %p138 = pneg %p51
      $region22: #{convolution_layer_forward.1} parent=19 // pred_check_branch
        %140 = sbr.rel (%p138) target = $region24
      $region23: #{convolution_layer_forward.1} parent=19 // pred_region
        %s141 = smul.u32 2, %s17
        %p142 = scmp.lt.s32.totalorder %s15, 1
        %s143 = scalar_select %p142, %s15, 1
        %p144 = scmp.lt.s32.totalorder %s16, 0
        %s145 = scalar_select %p144, %s16, 0
        %p146 = scmp.lt.s32.totalorder %s141, 1
        %s147 = scalar_select %p146, %s141, 1
        %s148 = smul.addr %s147, 3
        %s149 = smul.addr %s145, 6
        %s150 = sadd.s32 %s148, %s149
        %s151 = smul.addr %s143, 6
        %s152 = sadd.s32 %s150, %s151
        %s153 = smul.addr %s152, 4
        %s154 = scalar_lea.vmem %s0, %s153
        %s155 = smul.u32 2, %s17
      $region24: #{convolution_layer_forward.1} parent=19 // pred_fallthru
        _
    $region20: #{convolution_layer_forward.1} parent=5 // pred_fallthru
      _
    %p156 = scmp.le.s32.totalorder 1, %s8
    %p157 = scmp.lt.s32.totalorder %s8, 3
    %p158 = pnand %p156, %p157
    %p159 = pneg %p158
    // Predicated region
    $region25: #{convolution_layer_forward.1} parent=5 // pred_check
      _
    $region26: #{convolution_layer_forward.1} parent=5 // pred_check_branch
      %161 = sbr.rel (%p158) target = $region28
    $region27: #{convolution_layer_forward.1} parent=5 // pred_region
      %s162 = ssub.s32 %s8, 1
      %s163 = smul.u32 2, %s20
      %p164 = scmp.lt.s32.totalorder %s18, 1
      %s165 = scalar_select %p164, %s18, 1
      %p166 = scmp.lt.s32.totalorder %s19, 0
      %s167 = scalar_select %p166, %s19, 0
      %p168 = scmp.lt.s32.totalorder %s163, 1
      %s169 = scalar_select %p168, %s163, 1
      %s170 = smul.addr %s169, 3
      %s171 = smul.addr %s167, 6
      %s172 = sadd.s32 %s170, %s171
      %s173 = smul.addr %s165, 6
      %s174 = sadd.s32 %s172, %s173
      %s175 = smul.addr %s174, 4
      %s176 = scalar_lea.vmem %s0, %s175
      %p177 = pneg %p57
      %p178 = pneg %p54
      %p179 = scmp.lt.s32.totalorder %s20, 0
      %s180 = scalar_select %p179, %s20, 0
      %s181 = smul.addr %s180, 4
      %s182 = smul.addr %s181, 4
      %s183 = scalar_lea.vmem %s1, %s182
      %p184 = pneg %p83
      %p185 = pneg %p80
      %p186 = pneg %p111
      %p187 = pneg %p108
      %s188 = smul.u32 2, %s19
      %p189 = scmp.lt.s32.totalorder %s18, 1
      %s190 = scalar_select %p189, %s18, 1
      %p191 = scmp.lt.s32.totalorder %s188, 1
      %s192 = scalar_select %p191, %s188, 1
      %s193 = smul.addr %s190, 4
      %s194 = sadd.s32 %s192, %s193
      %s195 = smul.addr %s194, 8
      %s196 = scalar_lea.vmem %s2, %s195
      %s197 = smul.u32 2, %s20
      %p198 = scmp.lt.s32.totalorder %s18, 1
      %s199 = scalar_select %p198, %s18, 1
      %p200 = scmp.lt.s32.totalorder %s19, 0
      %s201 = scalar_select %p200, %s19, 0
      %p202 = scmp.lt.s32.totalorder %s197, 1
      %s203 = scalar_select %p202, %s197, 1
      %s204 = smul.addr %s203, 3
      %s205 = smul.addr %s201, 6
      %s206 = sadd.s32 %s204, %s205
      %s207 = smul.addr %s199, 6
      %s208 = sadd.s32 %s206, %s207
      %s209 = smul.addr %s208, 4
      %s210 = scalar_lea.vmem %s0, %s209
      %s211 = smul.u32 2, %s20
      %p212 = scmp.lt.s32.totalorder %s20, 0
      %s213 = scalar_select %p212, %s20, 0
      %s214 = smul.addr %s213, 4
      %s215 = smul.addr %s214, 4
      %s216 = scalar_lea.vmem %s1, %s215
      %s217 = smul.u32 2, %s19
      %p218 = scmp.lt.s32.totalorder %s18, 1
      %s219 = scalar_select %p218, %s18, 1
      %p220 = scmp.lt.s32.totalorder %s217, 1
      %s221 = scalar_select %p220, %s217, 1
      %s222 = smul.addr %s219, 4
      %s223 = sadd.s32 %s221, %s222
      %s224 = smul.addr %s223, 8
      %s225 = scalar_lea.vmem %s2, %s224
      %s226 = smul.u32 2, %s19
      %v228 = vld [vmem:[%s210] sm:$0xff]
      %v229 = vld [vmem:[%s210 + $0xc] sm:$0xff]
      %v232 = vunpack.c.l.b16 %v228
      %v233 = vunpack.c.h.b16 %v228
      %v234 = vunpack.c.l.b16 %v229
      %v235 = vunpack.c.h.b16 %v229
      %v236 = vpack.c.b16 %v234, %v232
      %v237 = vpack.c.b16 %v235, %v233
      %240 = vst [vmem:[#allocation2] sm:$0xff] %v236
      %241 = vst [vmem:[#allocation2 + $0x8] sm:$0xff] %v237
      %v242 = vld [vmem:[%s210] sm:$0xff]
      %v243 = vld [vmem:[%s210 + $0x8] sm:$0xf]
      %v244 = vld [vmem:[%s210 + $0xc] sm:$0xff]
      %v245 = vld [vmem:[%s210 + $0x14] sm:$0xf]
      %v250 = vunpack.c.l.b16 %v242
      %v251 = vunpack.c.h.b16 %v242
      %v252 = vunpack.c.l.b16 %v243
      %v253 = vunpack.c.l.b16 %v244
      %v254 = vunpack.c.h.b16 %v244
      %v255 = vunpack.c.l.b16 %v245
      %v256 = vpack.c.b16 %v253, %v250
      %v257 = vpack.c.b16 %v254, %v251
      %v258 = vpack.c.b16 %v255, %v252
      %259 = vrot.lane.b32.xlu0 %v256, 127
      %v260 = vpop.permute.xlu0 %259
      %261 = vrot.lane.b32.xlu0 %v257, 127
      %v262 = vpop.permute.xlu0 %261
      %263 = vrot.lane.b32.xlu0 %v258, 127
      %v264 = vpop.permute.xlu0 %263
      %vm265 = vcmask 1039360
      %v266 = vsel %vm265, %v260, %v262
      %v267 = vsel %vm265, %v262, %v264
      %270 = vst [vmem:[#allocation2 + $0x10] sm:$0xff] %v266
      %271 = vst [vmem:[#allocation2 + $0x18] sm:$0xff] %v267
      %v272 = vld [vmem:[%s210] sm:$0xff]
      %v273 = vld [vmem:[%s210 + $0x8] sm:$0xf]
      %v274 = vld [vmem:[%s210 + $0xc] sm:$0xff]
      %v275 = vld [vmem:[%s210 + $0x14] sm:$0xf]
      %v280 = vunpack.c.l.b16 %v272
      %v281 = vunpack.c.h.b16 %v272
      %v282 = vunpack.c.l.b16 %v273
      %v283 = vunpack.c.l.b16 %v274
      %v284 = vunpack.c.h.b16 %v274
      %v285 = vunpack.c.l.b16 %v275
      %v286 = vpack.c.b16 %v283, %v280
      %v287 = vpack.c.b16 %v284, %v281
      %v288 = vpack.c.b16 %v285, %v282
      %289 = vrot.lane.b32.xlu0 %v286, 126
      %v290 = vpop.permute.xlu0 %289
      %291 = vrot.lane.b32.xlu0 %v287, 126
      %v292 = vpop.permute.xlu0 %291
      %293 = vrot.lane.b32.xlu0 %v288, 126
      %v294 = vpop.permute.xlu0 %293
      %vm295 = vcmask 1031168
      %v296 = vsel %vm295, %v290, %v292
      %v297 = vsel %vm295, %v292, %v294
      %300 = vst [vmem:[#allocation2 + $0x20] sm:$0xff] %v296
      %301 = vst [vmem:[#allocation2 + $0x28] sm:$0xff] %v297
      %v302 = vld [vmem:[%s210] sm:$0xff]
      %v303 = vld [vmem:[%s210 + $0x8] sm:$0xf]
      %v304 = vld [vmem:[%s210 + $0xc] sm:$0xff]
      %v305 = vld [vmem:[%s210 + $0x14] sm:$0xf]
      %v310 = vunpack.c.l.b16 %v302
      %v311 = vunpack.c.h.b16 %v302
      %v312 = vunpack.c.l.b16 %v303
      %v313 = vunpack.c.l.b16 %v304
      %v314 = vunpack.c.h.b16 %v304
      %v315 = vunpack.c.l.b16 %v305
      %v316 = vpack.c.b16 %v313, %v310
      %v317 = vpack.c.b16 %v314, %v311
      %v318 = vpack.c.b16 %v315, %v312
      %319 = vrot.lane.b32.xlu0 %v316, 112
      %v320 = vpop.permute.xlu0 %319
      %321 = vrot.lane.b32.xlu0 %v317, 112
      %v322 = vpop.permute.xlu0 %321
      %323 = vrot.lane.b32.xlu0 %v318, 112
      %v324 = vpop.permute.xlu0 %323
      %vm325 = vcmask 916480
      %v326 = vsel %vm325, %v320, %v322
      %v327 = vsel %vm325, %v322, %v324
      %330 = vst [vmem:[#allocation2 + $0x30] sm:$0xff] %v326
      %331 = vst [vmem:[#allocation2 + $0x38] sm:$0xff] %v327
      %v332 = vld [vmem:[%s210] sm:$0xff]
      %v333 = vld [vmem:[%s210 + $0x8] sm:$0xf]
      %v334 = vld [vmem:[%s210 + $0xc] sm:$0xff]
      %v335 = vld [vmem:[%s210 + $0x14] sm:$0xf]
      %v340 = vunpack.c.l.b16 %v332
      %v341 = vunpack.c.h.b16 %v332
      %v342 = vunpack.c.l.b16 %v333
      %v343 = vunpack.c.l.b16 %v334
      %v344 = vunpack.c.h.b16 %v334
      %v345 = vunpack.c.l.b16 %v335
      %v346 = vpack.c.b16 %v343, %v340
      %v347 = vpack.c.b16 %v344, %v341
      %v348 = vpack.c.b16 %v345, %v342
      %349 = vrot.lane.b32.xlu0 %v346, 111
      %v350 = vpop.permute.xlu0 %349
      %351 = vrot.lane.b32.xlu0 %v347, 111
      %v352 = vpop.permute.xlu0 %351
      %353 = vrot.lane.b32.xlu0 %v348, 111
      %v354 = vpop.permute.xlu0 %353
      %vm355 = vcmask 908288
      %v356 = vsel %vm355, %v350, %v352
      %v357 = vsel %vm355, %v352, %v354
      %360 = vst [vmem:[#allocation2 + $0x40] sm:$0xff] %v356
      %361 = vst [vmem:[#allocation2 + $0x48] sm:$0xff] %v357
      %v362 = vld [vmem:[%s210] sm:$0xff]
      %v363 = vld [vmem:[%s210 + $0x8] sm:$0xf]
      %v364 = vld [vmem:[%s210 + $0xc] sm:$0xff]
      %v365 = vld [vmem:[%s210 + $0x14] sm:$0xf]
      %v370 = vunpack.c.l.b16 %v362
      %v371 = vunpack.c.h.b16 %v362
      %v372 = vunpack.c.l.b16 %v363
      %v373 = vunpack.c.l.b16 %v364
      %v374 = vunpack.c.h.b16 %v364
      %v375 = vunpack.c.l.b16 %v365
      %v376 = vpack.c.b16 %v373, %v370
      %v377 = vpack.c.b16 %v374, %v371
      %v378 = vpack.c.b16 %v375, %v372
      %379 = vrot.lane.b32.xlu0 %v376, 110
      %v380 = vpop.permute.xlu0 %379
      %381 = vrot.lane.b32.xlu0 %v377, 110
      %v382 = vpop.permute.xlu0 %381
      %383 = vrot.lane.b32.xlu0 %v378, 110
      %v384 = vpop.permute.xlu0 %383
      %vm385 = vcmask 900096
      %v386 = vsel %vm385, %v380, %v382
      %v387 = vsel %vm385, %v382, %v384
      %390 = vst [vmem:[#allocation2 + $0x50] sm:$0xff] %v386
      %391 = vst [vmem:[#allocation2 + $0x58] sm:$0xff] %v387
      %v392 = vld [vmem:[%s210] sm:$0xff]
      %v393 = vld [vmem:[%s210 + $0x8] sm:$0xf]
      %v394 = vld [vmem:[%s210 + $0xc] sm:$0xff]
      %v395 = vld [vmem:[%s210 + $0x14] sm:$0xf]
      %v400 = vunpack.c.l.b16 %v392
      %v401 = vunpack.c.h.b16 %v392
      %v402 = vunpack.c.l.b16 %v393
      %v403 = vunpack.c.l.b16 %v394
      %v404 = vunpack.c.h.b16 %v394
      %v405 = vunpack.c.l.b16 %v395
      %v406 = vpack.c.b16 %v403, %v400
      %v407 = vpack.c.b16 %v404, %v401
      %v408 = vpack.c.b16 %v405, %v402
      %409 = vrot.lane.b32.xlu0 %v406, 96
      %v410 = vpop.permute.xlu0 %409
      %411 = vrot.lane.b32.xlu0 %v407, 96
      %v412 = vpop.permute.xlu0 %411
      %413 = vrot.lane.b32.xlu0 %v408, 96
      %v414 = vpop.permute.xlu0 %413
      %vm415 = vcmask 785408
      %v416 = vsel %vm415, %v410, %v412
      %v417 = vsel %vm415, %v412, %v414
      %420 = vst [vmem:[#allocation2 + $0x60] sm:$0xff] %v416
      %421 = vst [vmem:[#allocation2 + $0x68] sm:$0xff] %v417
      %v422 = vld [vmem:[%s210] sm:$0xff]
      %v423 = vld [vmem:[%s210 + $0x8] sm:$0xf]
      %v424 = vld [vmem:[%s210 + $0xc] sm:$0xff]
      %v425 = vld [vmem:[%s210 + $0x14] sm:$0xf]
      %v430 = vunpack.c.l.b16 %v422
      %v431 = vunpack.c.h.b16 %v422
      %v432 = vunpack.c.l.b16 %v423
      %v433 = vunpack.c.l.b16 %v424
      %v434 = vunpack.c.h.b16 %v424
      %v435 = vunpack.c.l.b16 %v425
      %v436 = vpack.c.b16 %v433, %v430
      %v437 = vpack.c.b16 %v434, %v431
      %v438 = vpack.c.b16 %v435, %v432
      %439 = vrot.lane.b32.xlu0 %v436, 95
      %v440 = vpop.permute.xlu0 %439
      %441 = vrot.lane.b32.xlu0 %v437, 95
      %v442 = vpop.permute.xlu0 %441
      %443 = vrot.lane.b32.xlu0 %v438, 95
      %v444 = vpop.permute.xlu0 %443
      %vm445 = vcmask 777216
      %v446 = vsel %vm445, %v440, %v442
      %v447 = vsel %vm445, %v442, %v444
      %450 = vst [vmem:[#allocation2 + $0x70] sm:$0xff] %v446
      %451 = vst [vmem:[#allocation2 + $0x78] sm:$0xff] %v447
      %v452 = vld [vmem:[%s210] sm:$0xff]
      %v453 = vld [vmem:[%s210 + $0x8] sm:$0xf]
      %v454 = vld [vmem:[%s210 + $0xc] sm:$0xff]
      %v455 = vld [vmem:[%s210 + $0x14] sm:$0xf]
      %v460 = vunpack.c.l.b16 %v452
      %v461 = vunpack.c.h.b16 %v452
      %v462 = vunpack.c.l.b16 %v453
      %v463 = vunpack.c.l.b16 %v454
      %v464 = vunpack.c.h.b16 %v454
      %v465 = vunpack.c.l.b16 %v455
      %v466 = vpack.c.b16 %v463, %v460
      %v467 = vpack.c.b16 %v464, %v461
      %v468 = vpack.c.b16 %v465, %v462
      %469 = vrot.lane.b32.xlu0 %v466, 94
      %v470 = vpop.permute.xlu0 %469
      %471 = vrot.lane.b32.xlu0 %v467, 94
      %v472 = vpop.permute.xlu0 %471
      %473 = vrot.lane.b32.xlu0 %v468, 94
      %v474 = vpop.permute.xlu0 %473
      %vm475 = vcmask 769024
      %v476 = vsel %vm475, %v470, %v472
      %v477 = vsel %vm475, %v472, %v474
      %480 = vst [vmem:[#allocation2 + $0x80] sm:$0xff] %v476
      %481 = vst [vmem:[#allocation2 + $0x88] sm:$0xff] %v477
      %v482 = vld [vmem:[%s216] sm:$0xff]
      %v483 = vld [vmem:[%s216 + $0x8] sm:$0xff]
      %v484 = vld [vmem:[#allocation2] sm:$0xff]
      %v485 = vld [vmem:[#allocation2 + $0x8] sm:$0xff]
      %v486 = vld [vmem:[#allocation2 + $0x10] sm:$0xff]
      %v487 = vld [vmem:[#allocation2 + $0x18] sm:$0xff]
      %v488 = vld [vmem:[#allocation2 + $0x20] sm:$0xff]
      %v489 = vld [vmem:[#allocation2 + $0x28] sm:$0xff]
      %v490 = vld [vmem:[#allocation2 + $0x30] sm:$0xff]
      %v491 = vld [vmem:[#allocation2 + $0x38] sm:$0xff]
      %v492 = vld [vmem:[#allocation2 + $0x40] sm:$0xff]
      %v493 = vld [vmem:[#allocation2 + $0x48] sm:$0xff]
      %v494 = vld [vmem:[#allocation2 + $0x50] sm:$0xff]
      %v495 = vld [vmem:[#allocation2 + $0x58] sm:$0xff]
      %v496 = vld [vmem:[#allocation2 + $0x60] sm:$0xff]
      %v497 = vld [vmem:[#allocation2 + $0x68] sm:$0xff]
      %v498 = vld [vmem:[#allocation2 + $0x70] sm:$0xff]
      %v499 = vld [vmem:[#allocation2 + $0x78] sm:$0xff]
      %v500 = vld [vmem:[#allocation2 + $0x80] sm:$0xff]
      %v501 = vld [vmem:[#allocation2 + $0x88] sm:$0xff]
      %v504 = vunpack.c.l.b16 %v482
      %v505 = vunpack.c.h.b16 %v482
      %v506 = vunpack.c.l.b16 %v483
      %v507 = vunpack.c.h.b16 %v483
      %v508 = vpack.c.b16 %v506, %v504
      %v509 = vpack.c.b16 %v507, %v505
      %vm511 = vcmask 130048
      %v513 = vsel %vm511, %v509, 0
      %515 = vmatprep.subr.bf16.mxu0 %v485
      %516 = vmatpush1.bf16.msra.mxu0 %v484
      %517 = vmatprep.subr.bf16.mxu0 %v487
      %518 = vmatpush1.bf16.msra.mxu0 %v486
      %519 = vmatprep.subr.bf16.mxu0 %v489
      %520 = vmatpush1.bf16.msra.mxu0 %v488
      %521 = vmatprep.subr.bf16.mxu0 %v491
      %522 = vmatpush1.bf16.msra.mxu0 %v490
      %523 = vmatprep.subr.bf16.mxu0 %v493
      %524 = vmatpush1.bf16.msra.mxu0 %v492
      %525 = vmatprep.subr.bf16.mxu0 %v495
      %526 = vmatpush1.bf16.msra.mxu0 %v494
      %527 = vmatprep.subr.bf16.mxu0 %v497
      %528 = vmatpush1.bf16.msra.mxu0 %v496
      %529 = vmatprep.subr.bf16.mxu0 %v499
      %530 = vmatpush1.bf16.msra.mxu0 %v498
      %531 = vmatprep.subr.bf16.mxu0 %v501
      %532 = vmatpush1.bf16.msra.mxu0 %v500
      %533 = vmatprep.subr.bf16.mxu0 0
      %534 = vmatpush1.bf16.msra.mxu0 0
      %535 = vmatprep.subr.bf16.mxu0 0
      %536 = vmatpush1.bf16.msra.mxu0 0
      %537 = vmatprep.subr.bf16.mxu0 0
      %538 = vmatpush1.bf16.msra.mxu0 0
      %539 = vmatprep.subr.bf16.mxu0 0
      %540 = vmatpush1.bf16.msra.mxu0 0
      %541 = vmatprep.subr.bf16.mxu0 0
      %542 = vmatpush1.bf16.msra.mxu0 0
      %543 = vmatprep.subr.bf16.mxu0 0
      %544 = vmatpush1.bf16.msra.mxu0 0
      %545 = vmatprep.subr.bf16.mxu0 0
      %546 = vmatpush1.bf16.msra.mxu0 0
      %547 = vmatprep.mubr.bf16.mxu0 %v513
      %548 = vmatmul.mubr.bf16.gmra.mrb[0].mxu0 %v508
      %v549 = vpop.f32.mrb[0].mxu0
      %v550 = vadd.f32 0.0, %v549
      %v551 = vpop.f32.mrb[0].mxu0
      %v552 = vadd.f32 0.0, %v551
      %v553 = vpop.f32.mrb[0].mxu0
      %v554 = vadd.f32 0.0, %v553
      %v555 = vpop.f32.mrb[0].mxu0
      %v556 = vadd.f32 0.0, %v555
      %557 = vdwg.mxu0
      %p558 = scmp.eq.s32.totalorder %s20, 0
      // Predicated region
      $region29: #{convolution_layer_forward.1} parent=27 // pred_check
        %p559 = pneg %p558
      $region30: #{convolution_layer_forward.1} parent=27 // pred_check_branch
        %561 = sbr.rel (%p559) target = $region32
      $region31: #{convolution_layer_forward.1} parent=27 // pred_region
        %562 = vst [vmem:[%s225] sm:$0xff] %v550
        %563 = vst [vmem:[%s225 + $0x8] sm:$0xff] %v552
        %564 = vst [vmem:[%s225 + $0x10] sm:$0xff] %v554
        %565 = vst [vmem:[%s225 + $0x18] sm:$0xff] %v556
      $region32: #{convolution_layer_forward.1} parent=27 // pred_fallthru
        _
      %p566 = scmp.gt.s32.totalorder %s20, 0
      // Predicated region
      $region33: #{convolution_layer_forward.1} parent=27 // pred_check
        %p567 = pneg %p566
      $region34: #{convolution_layer_forward.1} parent=27 // pred_check_branch
        %569 = sbr.rel (%p567) target = $region36
      $region35: #{convolution_layer_forward.1} parent=27 // pred_region
        %v570 = vld [vmem:[%s225] sm:$0xff]
        %v571 = vld [vmem:[%s225 + $0x8] sm:$0xff]
        %v572 = vld [vmem:[%s225 + $0x10] sm:$0xff]
        %v573 = vld [vmem:[%s225 + $0x18] sm:$0xff]
        %v574 = vadd.f32 %v570, %v550
        %v575 = vadd.f32 %v571, %v552
        %v576 = vadd.f32 %v572, %v554
        %v577 = vadd.f32 %v573, %v556
        %578 = vst [vmem:[%s225] sm:$0xff] %v574
        %579 = vst [vmem:[%s225 + $0x8] sm:$0xff] %v575
        %580 = vst [vmem:[%s225 + $0x10] sm:$0xff] %v576
        %581 = vst [vmem:[%s225 + $0x18] sm:$0xff] %v577
      $region36: #{convolution_layer_forward.1} parent=27 // pred_fallthru
        _
      %s582 = smul.u32 2, %s19
      %p583 = scmp.lt.s32.totalorder %s18, 1
      %s584 = scalar_select %p583, %s18, 1
      %p585 = scmp.lt.s32.totalorder %s582, 1
      %s586 = scalar_select %p585, %s582, 1
      %s587 = smul.addr %s584, 4
      %s588 = sadd.s32 %s586, %s587
      %s589 = smul.addr %s588, 8
      %s590 = scalar_lea.vmem %s2, %s589
      // Predicated region
      $region37: #{convolution_layer_forward.1} parent=27 // pred_check
        %p591 = pneg %p108
      $region38: #{convolution_layer_forward.1} parent=27 // pred_check_branch
        %593 = sbr.rel (%p591) target = $region40
      $region39: #{convolution_layer_forward.1} parent=27 // pred_region
        %s594 = smul.u32 2, %s19
      $region40: #{convolution_layer_forward.1} parent=27 // pred_fallthru
        _
    $region28: #{convolution_layer_forward.1} parent=5 // pred_fallthru
      _
    %p595 = scmp.le.s32.totalorder 2, %s8
    // Predicated region
    $region41: #{convolution_layer_forward.1} parent=5 // pred_check
      %p596 = pneg %p595
    $region42: #{convolution_layer_forward.1} parent=5 // pred_check_branch
      %598 = sbr.rel (%p596) target = $region44
    $region43: #{convolution_layer_forward.1} parent=5 // pred_region
      %s599 = ssub.s32 %s8, 2
      // Predicated region
      $region45: #{convolution_layer_forward.1} parent=43 // pred_check
        %p600 = pneg %p114
      $region46: #{convolution_layer_forward.1} parent=43 // pred_check_branch
        %602 = sbr.rel (%p600) target = $region48
      $region47: #{convolution_layer_forward.1} parent=43 // pred_region
        %s603 = smul.u32 2, %s22
        %p604 = scmp.lt.s32.totalorder %s21, 1
        %s605 = scalar_select %p604, %s21, 1
        %p606 = scmp.lt.s32.totalorder %s603, 1
        %s607 = scalar_select %p606, %s603, 1
        %s608 = smul.addr %s605, 4
        %s609 = sadd.s32 %s607, %s608
        %s610 = smul.addr %s609, 8
        %s611 = scalar_lea.vmem %s2, %s610
      $region48: #{convolution_layer_forward.1} parent=43 // pred_fallthru
        _
    $region44: #{convolution_layer_forward.1} parent=5 // pred_fallthru
      _
  $region6: #{convolution_layer_forward.1} parent=0 // loop_footer
    %s12 = sadd.s32 1, %s8
  $region7: #{convolution_layer_forward.1} parent=0 // loop_footer_branch
    %7 = sbr.rel target = $region3
  $region8: #{convolution_layer_forward.1} parent=0 // loop_exit
    _

</llo_original>
